<compile_context>
chip_gen: v5e
topology: v5e:2x2
jax: 0.10.0
libtpu: 0.0.40
codegen_flags: <defaults>
</compile_context>

<pallas_src>
import functools
import math

import jax
import jax.numpy as jnp
from jax.experimental import pallas as pl
from jax.experimental.pallas import tpu as pltpu


def _embedding_gather_kernel(ids_ref, lut_hbm, out_ref, sem, *, n_tok: int,
                             scale: float):
    """Gather + scale one token tile.

    ids_ref : SMEM int32[n_tok]      all token ids (scalar prefetch)
    lut_hbm : HBM  [vocab, d_model]  embedding table (never copied whole)
    out_ref : VMEM [tb, d_model]     output rows for this tile
    sem     : DMA semaphore shared by the per-row gather copies
    """
    tb = out_ref.shape[0]
    base = pl.program_id(0) * tb
    last = n_tok - 1

    # Issue all row-gather DMAs (HBM row -> this tile's VMEM output block).
    @pl.loop(0, tb)
    def _start(r):
        # Clamp so a partial last tile never reads ids / lut out of bounds;
        # Pallas drops the write-back of rows past n_tok anyway.
        tok = ids_ref[jnp.minimum(base + r, last)]
        pltpu.make_async_copy(
            lut_hbm.at[pl.ds(tok, 1), :],
            out_ref.at[pl.ds(r, 1), :],
            sem,
        ).start()

    # Wait for all of them (equal-sized copies sharing one semaphore, so tb
    # single-row waits drain exactly the tb completions).
    @pl.loop(0, tb)
    def _wait(r):
        pltpu.make_async_copy(
            lut_hbm.at[pl.ds(0, 1), :],
            out_ref.at[pl.ds(0, 1), :],
            sem,
        ).wait()

    # sqrt(d_model) scale applied post-gather in f32 on the (tb, d_model) tile.
    out_ref[...] = (out_ref[...].astype(jnp.float32) * scale).astype(out_ref.dtype)


def embeddings_forward(x, lut, *, token_block: int = 256):
    """x: int (B, S) token ids; lut: (vocab, d_model) -> (B, S, d_model)."""
    B, S = x.shape
    vocab, d_model = lut.shape
    n_tok = B * S

    # Clamp instead of reading out-of-bounds for bad ids (PyTorch would raise).
    ids = jnp.clip(x.reshape(n_tok).astype(jnp.int32), 0, vocab - 1)

    # Token tile size: either the full token count (small inputs -> one block
    # equal to the array dim) or a sublane-aligned multiple of 8.
    if n_tok <= token_block:
        tb = n_tok
    else:
        tb = max(8, (token_block // 8) * 8)
    grid = (pl.cdiv(n_tok, tb),)

    scale = float(math.sqrt(d_model))

    # Generation-aware VMEM budget with headroom (64 MiB physical on v7x,
    # 128 MiB on v5e/v6e).  Actual need: double-buffered output tiles only.
    out_blk_bytes = tb * d_model * jnp.dtype(lut.dtype).itemsize
    try:
        vmem_cap = int(pltpu.get_tpu_info().vmem_capacity_bytes)
    except Exception:
        vmem_cap = 64 * 1024 * 1024
    vmem_limit = int(min(vmem_cap - (16 << 20),
                         max(32 << 20, 2 * out_blk_bytes + (8 << 20))))

    kernel = functools.partial(_embedding_gather_kernel, n_tok=n_tok, scale=scale)

    out_flat = pl.pallas_call(
        kernel,
        out_shape=jax.ShapeDtypeStruct((n_tok, d_model), lut.dtype),
        grid_spec=pltpu.PrefetchScalarGridSpec(
            num_scalar_prefetch=1,                        # ids -> SMEM
            grid=grid,
            in_specs=[pl.BlockSpec(memory_space=pl.ANY)], # lut stays in HBM
            out_specs=pl.BlockSpec((tb, d_model), lambda i, ids: (i, 0)),
            scratch_shapes=[pltpu.SemaphoreType.DMA(())],
        ),
        compiler_params=pltpu.CompilerParams(
            dimension_semantics=("parallel",),            # independent tiles
            vmem_limit_bytes=vmem_limit,
        ),
    )(ids, lut)

    return out_flat.reshape(B, S, d_model)


if __name__ == "__main__":
    # Deterministic parameter / input construction
    # (nn.Embedding default init ~ N(0, 1)).
    key = jax.random.PRNGKey(0)
    k_lut, k_ids = jax.random.split(key)

    vocab = 64
    d_model = 128
    B, S = 2, 8

    lut = jax.random.normal(k_lut, (vocab, d_model), dtype=jnp.float32)
    x = jax.random.randint(k_ids, (B, S), 0, vocab, dtype=jnp.int32)

    out = embeddings_forward(x, lut)
    out = jax.block_until_ready(out)

    # Cross-check against a plain-JAX reference of the PyTorch semantics.
    ref = (jnp.take(lut, x.reshape(-1), axis=0).reshape(B, S, d_model)
           * math.sqrt(d_model))
    assert out.shape == (B, S, d_model)
    assert jnp.allclose(out, ref, atol=1e-5, rtol=1e-6), float(
        jnp.max(jnp.abs(out - ref)))

    print("KERNEL_OK")
</pallas_src>

<mosaic_0001>
module attributes {stable_mosaic.version = 11 : i64} {
  func.func @_embedding_gather_kernel(%arg0: i32, %arg1: memref<16xi32, #tpu.memory_space<smem>>, %arg2: memref<64x128xf32, #tpu.memory_space<any>>, %arg3: memref<16x128xf32, #tpu.memory_space<vmem>>, %arg4: memref<!tpu.dma_semaphore, #tpu.memory_space<semaphore_mem>>) attributes {dimension_semantics = [#tpu.dimension_semantics<parallel>], iteration_bounds = array<i64: 1>, scalar_prefetch = 1 : i64, scratch_operands = 1 : i64, tpu.core_type = #tpu.core_type<tc>, window_params = [{}, {transform_indices = @transform_1, window_bounds = array<i64: 16, 128>}]} {
    %c16_i32 = arith.constant 16 : i32
    %0 = arith.muli %arg0, %c16_i32 : i32
    %c0_i32 = arith.constant 0 : i32
    %c16_i32_0 = arith.constant 16 : i32
    %1 = arith.addi %c0_i32, %c16_i32_0 : i32
    %c1_i32 = arith.constant 1 : i32
    scf.for %arg5 = %c0_i32 to %1 step %c1_i32  : i32 {
      %c1_i32_8 = arith.constant 1 : i32
      %7 = arith.muli %arg5, %c1_i32_8 : i32
      %c0_i32_9 = arith.constant 0 : i32
      %8 = arith.addi %c0_i32_9, %7 : i32
      %9 = arith.addi %0, %8 : i32
      %c15_i32 = arith.constant 15 : i32
      %10 = arith.minsi %9, %c15_i32 : i32
      %11 = arith.index_cast %10 : i32 to index
      %12 = memref.load %arg1[%11] : memref<16xi32, #tpu.memory_space<smem>>
      %c0_i32_10 = arith.constant 0 : i32
      %13 = tpu.memref_slice %arg2[%12, %c0_i32_10] : memref<64x128xf32, #tpu.memory_space<any>> -> memref<1x128xf32, #tpu.memory_space<any>>
      %c0_i32_11 = arith.constant 0 : i32
      %14 = tpu.memref_slice %arg3[%8, %c0_i32_11] : memref<16x128xf32, #tpu.memory_space<vmem>> -> memref<1x128xf32, #tpu.memory_space<vmem>>
      tpu.enqueue_dma source(%13 : memref<1x128xf32, #tpu.memory_space<any>>) target(%14 : memref<1x128xf32, #tpu.memory_space<vmem>>) target_semaphore(%arg4 : memref<!tpu.dma_semaphore, #tpu.memory_space<semaphore_mem>>)
    }
    %c16_i32_1 = arith.constant 16 : i32
    %c0_i32_2 = arith.constant 0 : i32
    %c16_i32_3 = arith.constant 16 : i32
    %2 = arith.addi %c0_i32_2, %c16_i32_3 : i32
    %c1_i32_4 = arith.constant 1 : i32
    scf.for %arg5 = %c0_i32_2 to %2 step %c1_i32_4  : i32 {
      %c0_i32_8 = arith.constant 0 : i32
      %c0_i32_9 = arith.constant 0 : i32
      %7 = tpu.memref_slice %arg2[%c0_i32_8, %c0_i32_9] : memref<64x128xf32, #tpu.memory_space<any>> -> memref<1x128xf32, #tpu.memory_space<any>>
      %c0_i32_10 = arith.constant 0 : i32
      %c0_i32_11 = arith.constant 0 : i32
      %8 = tpu.memref_slice %arg3[%c0_i32_10, %c0_i32_11] : memref<16x128xf32, #tpu.memory_space<vmem>> -> memref<1x128xf32, #tpu.memory_space<vmem>>
      tpu.wait_dma2 semaphore(%arg4 : memref<!tpu.dma_semaphore, #tpu.memory_space<semaphore_mem>>) src(%7 : memref<1x128xf32, #tpu.memory_space<any>>) dst(%8 : memref<1x128xf32, #tpu.memory_space<vmem>>)
    }
    %c0 = arith.constant 0 : index
    %c0_5 = arith.constant 0 : index
    %3 = vector.load %arg3[%c0, %c0_5] : memref<16x128xf32, #tpu.memory_space<vmem>>, vector<16x128xf32>
    %cst = arith.constant 11.3137083 : f32
    %4 = vector.broadcast %cst : f32 to vector<16x128xf32>
    %5 = arith.mulf %3, %4 : vector<16x128xf32>
    %c0_6 = arith.constant 0 : index
    %c0_7 = arith.constant 0 : index
    %6 = vector.load %arg3[%c0_6, %c0_7] : memref<16x128xf32, #tpu.memory_space<vmem>>, vector<16x128xf32>
    tpu.vector_store %arg3[%c0_6, %c0_7], %5 {strides = array<i32>} : memref<16x128xf32, #tpu.memory_space<vmem>>, vector<16x128xf32>,
    return
  }
  func.func @transform_1(%arg0: i32, %arg1: memref<16xi32, #tpu.memory_space<smem>>) -> (i32, i32) {
    %c0_i32 = arith.constant 0 : i32
    %c0_i32_0 = arith.constant 0 : i32
    return %arg0, %c0_i32 : i32, i32
  }
}

</mosaic_0001>

<llo_original>
// kernel: tpu_custom_call.1
$region0: #{tpu_custom_call.1}
  #allocation0 [shape = 'u32[]', space=smem, size = 0x4, offset = 0x4, fixed_abs, tag = 'smem constant byte address 0x4 - core index']
  #allocation1 [shape = 'u32[72,128]{1,0:T(1,128)}', space=vmem, size = 0x9000, scoped, tag = 'internal scratch']
  #allocation2 [shape = 's32[1]{0}', space=sflag, size = 0x4, scoped, tag = 'scratch operand']
  #allocation3 [shape = 's32[1]{0}', space=sflag, size = 0x4, scoped, tag = 'scoped memory for tpu_custom_call.1']
  #allocation4 [shape = 'u8[512]{0}', space=smem, size = 0x200, scoped, tag = 'prefetched SMEM operand 0']
  #allocation7 [shape = 's32[]', space=sflag, size = 0x4, offset = 0, fixed_abs, tag = 'sflag constant byte address 0x0 - dummy sync flag']
  #allocation8 [shape = 's32[]', space=sflag, size = 0x4, offset = 0, fixed_abs, tag = 'sflag constant byte address 0x0 - dummy sync flag']
  #allocation9 [shape = 'u32[]', space=smem, size = 0x4, offset = 0x44, fixed_abs, tag = 'smem constant byte address 0x44 - assertion arg 0']
  #allocation10 [shape = 'u32[]', space=smem, size = 0x4, offset = 0x48, fixed_abs, tag = 'smem constant byte address 0x48 - assertion arg 1']
  %s0 = inlined_call_operand.hbm [shape: s32[16], index: 0, kind: input, shape index: {}]
  %s1 = inlined_call_operand.hbm [shape: f32[64,128], index: 1, kind: input, shape index: {}]
  %s2 = inlined_call_operand.hbm [shape: f32[16,128], index: 2, kind: output, shape index: {}]
  %s3 = sld [smem:[#allocation0]]
  $region28: #{tpu_custom_call.1} parent=0
    _
  %s5 = ssub.s32 1, %s3
  %s6 = scalar_select 0, %s5, %s3
  %s8 = sshll.u32 %s0, 4
  %s9 = int_to_ptr.hbm [resolvable:$true] %s8
  %11 = dma.hbm_to_smem %s9, 16, [#allocation4], [#allocation3]
  %13 = dma.done [#allocation3], 16
  %14 = sfence
  $region1: #{tpu_custom_call.1} parent=0
    #allocation5 [shape = 'u8[8192]{0}', space=vmem, size = 0x2000, scoped, tag = 'output window, operand 0, single buffered']
    #allocation6 [shape = 's32[1]{0}', space=sflag, size = 0x4, scoped, tag = 'scoped memory for tpu_custom_call.1']
    %15 = vsyncpa [#allocation6], 0
    %s16 = smul.u32 0, 16
    loop: start=0, step=1, limit=16
    $region2: #{tpu_custom_call.1} parent=1 // loop_pre_header
      _
    $region3: #{tpu_custom_call.1} parent=1 // loop_header
      %s18 = sphi 0, %s22
      %p19 = scmp.ge.s32.totalorder %s18, 16
    $region4: #{tpu_custom_call.1} parent=1 // loop_header_branch
      %21 = sbr.rel (%p19) target = $region8
    $region5: #{tpu_custom_call.1} parent=1 // loop_body
      %s23 = sadd.s32 %s16, %s18
      %p24 = scmp.lt.s32.totalorder %s23, 15
      %s25 = scalar_select %p24, %s23, 15
      %s26 = sld [smem:[#allocation4 + %s25]]
      %s27 = scalar_lea.hbm %s1, %s26
      %s28 = scalar_lea.vmem [#allocation5], %s18
      // Predicated region
      $region9: #{tpu_custom_call.1} parent=5 // pred_check
        _
      $region10: #{tpu_custom_call.1} parent=5 // pred_check_branch
        %30 = sbr.rel target = $region12
      $region11: #{tpu_custom_call.1} parent=5 // pred_region
        %31 = sst [smem:[#allocation9]] [#allocation8]
        %32 = sst [smem:[#allocation10]] [#allocation7]
      $region12: #{tpu_custom_call.1} parent=5 // pred_fallthru
        _
      %34 = shalt.err (0)
      %s36 = sshll.u32 %s27, 4
      %s37 = int_to_ptr.hbm [resolvable:$true] %s36
      %s38 = sshll.u32 %s28, 4
      %s39 = int_to_ptr.vmem [resolvable:$true] %s38
      %41 = dma.hbm_to_vmem [thread:$0]  %s37, 16, %s39, [#allocation2]
    $region6: #{tpu_custom_call.1} parent=1 // loop_footer
      %s22 = sadd.s32 1, %s18
    $region7: #{tpu_custom_call.1} parent=1 // loop_footer_branch
      %17 = sbr.rel target = $region3
    $region8: #{tpu_custom_call.1} parent=1 // loop_exit
      _
    loop: start=0, step=1, limit=16
    $region13: #{tpu_custom_call.1} parent=1 // loop_pre_header
      _
    $region14: #{tpu_custom_call.1} parent=1 // loop_header
      %s43 = sphi 0, %s47
      %p44 = scmp.ge.s32.totalorder %s43, 16
    $region15: #{tpu_custom_call.1} parent=1 // loop_header_branch
      %46 = sbr.rel (%p44) target = $region19
    $region16: #{tpu_custom_call.1} parent=1 // loop_body
      %s48 = smul.u32 1, 1
      %s49 = sshll.u32 %s48, 4
      %50 = dma.done [#allocation2], %s49
    $region17: #{tpu_custom_call.1} parent=1 // loop_footer
      %s47 = sadd.s32 1, %s43
    $region18: #{tpu_custom_call.1} parent=1 // loop_footer_branch
      %42 = sbr.rel target = $region14
    $region19: #{tpu_custom_call.1} parent=1 // loop_exit
      _
    %v51 = vld [vmem:[#allocation5] sm:$0xff]
    %v52 = vld [vmem:[#allocation5 + $0x8] sm:$0xff]
    %v53 = vmul.f32 %v51, 11.313708
    %v54 = vmul.f32 %v52, 11.313708
    %55 = vst [vmem:[#allocation5] sm:$0xff] %v53
    %56 = vst [vmem:[#allocation5 + $0x8] sm:$0xff] %v54
    // Predicated region
    $region20: #{tpu_custom_call.1} parent=1 // pred_check
      _
    $region21: #{tpu_custom_call.1} parent=1 // pred_check_branch
      %58 = sbr.rel (0) target = $region23
    $region22: #{tpu_custom_call.1} parent=1 // pred_region
      %60 = vsyncadd [#allocation6], 0
      %s61 = sshll.u32 [#allocation5], 4
      %s62 = int_to_ptr.vmem [resolvable:$true] %s61
      %s63 = sshll.u32 %s2, 4
      %s64 = int_to_ptr.hbm [resolvable:$true] %s63
      %69 = dma.vmem_to_hbm [thread:$0]  %s62, 256, %s64, [#allocation6], 128, 128, 8
    $region23: #{tpu_custom_call.1} parent=1 // pred_fallthru
      _
    // Predicated region
    $region24: #{tpu_custom_call.1} parent=1 // pred_check
      _
    $region25: #{tpu_custom_call.1} parent=1 // pred_check_branch
      %71 = sbr.rel (0) target = $region27
    $region26: #{tpu_custom_call.1} parent=1 // pred_region
      %73 = dma.done [#allocation6], 256
    $region27: #{tpu_custom_call.1} parent=1 // pred_fallthru
      _
    %74 = vsyncpa [#allocation6], 1
  %75 = vsyncmov [#allocation2]
  %s76 = vpop.sfrf %75
  %p77 = scmp.eq.s32.totalorder %s76, 0
  %p78 = pneg %p77
  %80 = shalt.err (%p78)

</llo_original>
